<compile_context>
chip_gen: v5e
topology: v5e:2x2
jax: 0.10.0
libtpu: 0.0.40
codegen_flags: <defaults>
</compile_context>

<pallas_src>
import functools

import jax
import jax.numpy as jnp
from jax.experimental import pallas as pl
from jax.experimental.pallas import tpu as pltpu

_LANE = 128
_SUBLANE = 8
_NEG_BIG = -1e9  # bias for padded action columns -> exp() underflows to 0


def _round_up(x, m):
    return (x + m - 1) // m * m


def _pad2d(a, rows, cols, value=0.0):
    r, c = a.shape
    return jnp.pad(a, ((0, rows - r), (0, cols - c)), constant_values=value)


# ----------------------------- Pallas kernel ------------------------------ #
def actor_kernel(x_ref, w1_ref, b1_ref, w2_ref, b2_ref, w3_ref, b3_ref, o_ref):
    x = x_ref[...]                                                # (TB, S_p) bf16

    # fc1 + tanh  (MXU bf16 matmul, f32 accumulate; tanh on EUP in f32)
    h1 = jnp.tanh(
        jnp.dot(x, w1_ref[...], preferred_element_type=jnp.float32) + b1_ref[...]
    )                                                             # (TB, H_p) f32

    # fc2 + tanh
    h2 = jnp.tanh(
        jnp.dot(h1.astype(jnp.bfloat16), w2_ref[...],
                preferred_element_type=jnp.float32) + b2_ref[...]
    )                                                             # (TB, H_p) f32

    # fc3 logits (padded action lanes get -1e9 from the padded bias)
    logits = (
        jnp.dot(h2.astype(jnp.bfloat16), w3_ref[...],
                preferred_element_type=jnp.float32) + b3_ref[...]
    )                                                             # (TB, A_p) f32

    # numerically stable softmax over the last (lane) axis
    m = jnp.max(logits, axis=-1, keepdims=True)
    e = jnp.exp(logits - m)                                       # padded lanes -> 0
    denom = jnp.sum(e, axis=-1, keepdims=True)
    inv = pl.reciprocal(denom, approx=True)                       # EUP vrcp
    inv = inv * (2.0 - denom * inv)                               # one Newton step
    o_ref[...] = (e * inv).astype(o_ref.dtype)                    # lane-dense store


# ------------------------------ JAX wrapper -------------------------------- #
@functools.partial(jax.jit, static_argnames=("block_b",))
def actor_forward(x, w1, b1, w2, b2, w3, b3, *, block_b=256):
    B, S = x.shape
    H = w1.shape[1]
    A = w3.shape[1]

    S_p = _round_up(S, _LANE)
    H_p = _round_up(H, _LANE)
    A_p = _round_up(A, _LANE)

    # batch tile: large enough to pipeline, shrunk for tiny batches
    TB = min(block_b, _round_up(B, _SUBLANE))
    B_p = _round_up(B, TB)

    # zero-pad to lane/sublane aligned shapes (exact), cast matmul operands to bf16
    xp = _pad2d(x, B_p, S_p).astype(jnp.bfloat16)
    w1p = _pad2d(w1, S_p, H_p).astype(jnp.bfloat16)
    w2p = _pad2d(w2, H_p, H_p).astype(jnp.bfloat16)
    w3p = _pad2d(w3, H_p, A_p).astype(jnp.bfloat16)
    b1p = _pad2d(b1.reshape(1, -1), 1, H_p).astype(jnp.float32)
    b2p = _pad2d(b2.reshape(1, -1), 1, H_p).astype(jnp.float32)
    b3p = _pad2d(b3.reshape(1, -1), 1, A_p, value=_NEG_BIG).astype(jnp.float32)

    grid = (B_p // TB,)

    # weights/biases: same block every grid step -> stay resident in VMEM
    resident = lambda shape: pl.BlockSpec(shape, lambda i: (0,) * len(shape))

    out = pl.pallas_call(
        actor_kernel,
        out_shape=jax.ShapeDtypeStruct((B_p, A_p), jnp.float32),
        grid=grid,
        in_specs=[
            pl.BlockSpec((TB, S_p), lambda i: (i, 0)),
            resident(w1p.shape), resident(b1p.shape),
            resident(w2p.shape), resident(b2p.shape),
            resident(w3p.shape), resident(b3p.shape),
        ],
        out_specs=pl.BlockSpec((TB, A_p), lambda i: (i, 0)),
        compiler_params=pltpu.CompilerParams(
            dimension_semantics=("parallel",),   # megacore sharding on v7x
            vmem_limit_bytes=32 << 20,           # safe on v5e/v6e/v7x
        ),
    )(xp, w1p, b1p, w2p, b2p, w3p, b3p)

    return out[:B, :A]


# ------------------------ deterministic parameter init --------------------- #
def orthogonal_init(key, in_dim, out_dim, gain=1.0):
    """Deterministic orthogonal init like nn.init.orthogonal_.
    Returns W with shape (in_dim, out_dim) for x @ W."""
    a = jax.random.normal(key, (max(in_dim, out_dim), min(in_dim, out_dim)),
                          dtype=jnp.float32)
    q, r = jnp.linalg.qr(a)
    q = q * jnp.sign(jnp.diagonal(r))          # fix sign for determinism
    if in_dim < out_dim:
        q = q.T                                # (in_dim, out_dim)
    w = gain * q[:in_dim, :out_dim]
    return w.astype(jnp.float32)


def make_params(key, state_dim, hidden_width, action_dim):
    k1, k2, k3 = jax.random.split(key, 3)
    w1 = orthogonal_init(k1, state_dim, hidden_width, gain=1.0)
    w2 = orthogonal_init(k2, hidden_width, hidden_width, gain=1.0)
    w3 = orthogonal_init(k3, hidden_width, action_dim, gain=0.01)
    b1 = jnp.zeros((1, hidden_width), jnp.float32)
    b2 = jnp.zeros((1, hidden_width), jnp.float32)
    b3 = jnp.zeros((1, action_dim), jnp.float32)
    return w1, b1, w2, b2, w3, b3


# ---------------------------------- main ----------------------------------- #
if __name__ == "__main__":
    # small shapes implied by the module: (batch, state_dim) -> hidden -> action
    batch, state_dim, hidden_width, action_dim = 8, 16, 32, 8

    key = jax.random.PRNGKey(0)
    kx, kp = jax.random.split(key)

    x = jax.random.normal(kx, (batch, state_dim), dtype=jnp.float32)
    params = make_params(kp, state_dim, hidden_width, action_dim)

    a_prob = actor_forward(x, *params)
    a_prob = jax.block_until_ready(a_prob)

    # sanity: rows of a_prob are probability distributions
    assert a_prob.shape == (batch, action_dim)
    assert bool(jnp.all(jnp.abs(jnp.sum(a_prob, axis=1) - 1.0) < 1e-5))

    w1, b1, w2, b2, w3, b3 = params

    # reference matched to the kernel's bf16 MXU inputs (tight tolerance)
    xb = x.astype(jnp.bfloat16)
    h = jnp.tanh(jnp.dot(xb, w1.astype(jnp.bfloat16),
                         preferred_element_type=jnp.float32) + b1)
    h = jnp.tanh(jnp.dot(h.astype(jnp.bfloat16), w2.astype(jnp.bfloat16),
                         preferred_element_type=jnp.float32) + b2)
    logits = jnp.dot(h.astype(jnp.bfloat16), w3.astype(jnp.bfloat16),
                     preferred_element_type=jnp.float32) + b3
    ref_bf16 = jax.nn.softmax(logits, axis=1)
    assert bool(jnp.allclose(a_prob, ref_bf16, atol=1e-4)), "mismatch vs bf16 ref"

    # full-precision reference (semantics check; looser tol for bf16 matmuls)
    hf = jnp.tanh(x @ w1 + b1)
    hf = jnp.tanh(hf @ w2 + b2)
    ref_f32 = jax.nn.softmax(hf @ w3 + b3, axis=1)
    assert bool(jnp.allclose(a_prob, ref_f32, atol=2e-2)), "mismatch vs f32 ref"

    print("KERNEL_OK")
</pallas_src>

<mosaic_0001>
module attributes {stable_mosaic.version = 11 : i64} {
  func.func @actor_kernel(%arg0: i32, %arg1: memref<8x128xbf16, #tpu.memory_space<vmem>>, %arg2: memref<128x128xbf16, #tpu.memory_space<vmem>>, %arg3: memref<1x128xf32, #tpu.memory_space<vmem>>, %arg4: memref<128x128xbf16, #tpu.memory_space<vmem>>, %arg5: memref<1x128xf32, #tpu.memory_space<vmem>>, %arg6: memref<128x128xbf16, #tpu.memory_space<vmem>>, %arg7: memref<1x128xf32, #tpu.memory_space<vmem>>, %arg8: memref<8x128xf32, #tpu.memory_space<vmem>>) attributes {dimension_semantics = [#tpu.dimension_semantics<parallel>], iteration_bounds = array<i64: 1>, scalar_prefetch = 0 : i64, scratch_operands = 0 : i64, tpu.core_type = #tpu.core_type<tc>, window_params = [{transform_indices = @transform_0, window_bounds = array<i64: 8, 128>}, {pipeline_mode = #tpu.pipeline_mode<synchronous>, transform_indices = @transform_1, window_bounds = array<i64: 128, 128>}, {pipeline_mode = #tpu.pipeline_mode<synchronous>, transform_indices = @transform_2, window_bounds = array<i64: 1, 128>}, {pipeline_mode = #tpu.pipeline_mode<synchronous>, transform_indices = @transform_3, window_bounds = array<i64: 128, 128>}, {pipeline_mode = #tpu.pipeline_mode<synchronous>, transform_indices = @transform_4, window_bounds = array<i64: 1, 128>}, {pipeline_mode = #tpu.pipeline_mode<synchronous>, transform_indices = @transform_5, window_bounds = array<i64: 128, 128>}, {pipeline_mode = #tpu.pipeline_mode<synchronous>, transform_indices = @transform_6, window_bounds = array<i64: 1, 128>}, {transform_indices = @transform_7, window_bounds = array<i64: 8, 128>}]} {
    %c0 = arith.constant 0 : index
    %c0_0 = arith.constant 0 : index
    %0 = vector.load %arg1[%c0, %c0_0] : memref<8x128xbf16, #tpu.memory_space<vmem>>, vector<8x128xbf16>
    %c0_1 = arith.constant 0 : index
    %c0_2 = arith.constant 0 : index
    %1 = vector.load %arg2[%c0_1, %c0_2] : memref<128x128xbf16, #tpu.memory_space<vmem>>, vector<128x128xbf16>
    %cst = arith.constant dense<0.000000e+00> : vector<8x128xf32>
    %2 = tpu.matmul %0, %1, %cst {dimension_numbers = #tpu.dot_dimension_numbers<[1], [0], [0], [1], [0, 0, 1, 1], [], []>} : vector<8x128xbf16>, vector<128x128xbf16>, vector<8x128xf32> -> vector<8x128xf32>
    %c0_3 = arith.constant 0 : index
    %c0_4 = arith.constant 0 : index
    %3 = vector.load %arg3[%c0_3, %c0_4] : memref<1x128xf32, #tpu.memory_space<vmem>>, vector<1x128xf32>
    %4 = vector.broadcast %3 : vector<1x128xf32> to vector<8x128xf32>
    %5 = arith.addf %2, %4 : vector<8x128xf32>
    %6 = math.tanh %5 : vector<8x128xf32>
    %7 = arith.truncf %6 : vector<8x128xf32> to vector<8x128xbf16>
    %c0_5 = arith.constant 0 : index
    %c0_6 = arith.constant 0 : index
    %8 = vector.load %arg4[%c0_5, %c0_6] : memref<128x128xbf16, #tpu.memory_space<vmem>>, vector<128x128xbf16>
    %cst_7 = arith.constant dense<0.000000e+00> : vector<8x128xf32>
    %9 = tpu.matmul %7, %8, %cst_7 {dimension_numbers = #tpu.dot_dimension_numbers<[1], [0], [0], [1], [0, 0, 1, 1], [], []>} : vector<8x128xbf16>, vector<128x128xbf16>, vector<8x128xf32> -> vector<8x128xf32>
    %c0_8 = arith.constant 0 : index
    %c0_9 = arith.constant 0 : index
    %10 = vector.load %arg5[%c0_8, %c0_9] : memref<1x128xf32, #tpu.memory_space<vmem>>, vector<1x128xf32>
    %11 = vector.broadcast %10 : vector<1x128xf32> to vector<8x128xf32>
    %12 = arith.addf %9, %11 : vector<8x128xf32>
    %13 = math.tanh %12 : vector<8x128xf32>
    %14 = arith.truncf %13 : vector<8x128xf32> to vector<8x128xbf16>
    %c0_10 = arith.constant 0 : index
    %c0_11 = arith.constant 0 : index
    %15 = vector.load %arg6[%c0_10, %c0_11] : memref<128x128xbf16, #tpu.memory_space<vmem>>, vector<128x128xbf16>
    %cst_12 = arith.constant dense<0.000000e+00> : vector<8x128xf32>
    %16 = tpu.matmul %14, %15, %cst_12 {dimension_numbers = #tpu.dot_dimension_numbers<[1], [0], [0], [1], [0, 0, 1, 1], [], []>} : vector<8x128xbf16>, vector<128x128xbf16>, vector<8x128xf32> -> vector<8x128xf32>
    %c0_13 = arith.constant 0 : index
    %c0_14 = arith.constant 0 : index
    %17 = vector.load %arg7[%c0_13, %c0_14] : memref<1x128xf32, #tpu.memory_space<vmem>>, vector<1x128xf32>
    %18 = vector.broadcast %17 : vector<1x128xf32> to vector<8x128xf32>
    %19 = arith.addf %16, %18 : vector<8x128xf32>
    %cst_15 = arith.constant dense<0xFF800000> : vector<8xf32>
    %20 = vector.multi_reduction <maximumf>, %19, %cst_15 [1] : vector<8x128xf32> to vector<8xf32>
    %21 = vector.shape_cast %20 : vector<8xf32> to vector<8x1xf32>
    %22 = vector.broadcast %21 : vector<8x1xf32> to vector<8x128xf32>
    %23 = arith.subf %19, %22 : vector<8x128xf32>
    %24 = math.exp %23 : vector<8x128xf32>
    %cst_16 = arith.constant dense<0.000000e+00> : vector<8xf32>
    %25 = vector.multi_reduction <add>, %24, %cst_16 [1] : vector<8x128xf32> to vector<8xf32>
    %26 = vector.shape_cast %25 : vector<8xf32> to vector<8x1xf32>
    %27 = tpu.reciprocal %26 {approx = true} : vector<8x1xf32> -> vector<8x1xf32>
    %28 = arith.mulf %26, %27 : vector<8x1xf32>
    %cst_17 = arith.constant 2.000000e+00 : f32
    %29 = vector.broadcast %cst_17 : f32 to vector<8x1xf32>
    %30 = arith.subf %29, %28 : vector<8x1xf32>
    %31 = arith.mulf %27, %30 : vector<8x1xf32>
    %32 = vector.broadcast %31 : vector<8x1xf32> to vector<8x128xf32>
    %33 = arith.mulf %24, %32 : vector<8x128xf32>
    %c0_18 = arith.constant 0 : index
    %c0_19 = arith.constant 0 : index
    %34 = vector.load %arg8[%c0_18, %c0_19] : memref<8x128xf32, #tpu.memory_space<vmem>>, vector<8x128xf32>
    tpu.vector_store %arg8[%c0_18, %c0_19], %33 {strides = array<i32>} : memref<8x128xf32, #tpu.memory_space<vmem>>, vector<8x128xf32>,
    return
  }
  func.func @transform_0(%arg0: i32) -> (i32, i32) {
    %c0_i32 = arith.constant 0 : i32
    %c0_i32_0 = arith.constant 0 : i32
    return %arg0, %c0_i32 : i32, i32
  }
  func.func @transform_1(%arg0: i32) -> (i32, i32) {
    %c0_i32 = arith.constant 0 : i32
    %c0_i32_0 = arith.constant 0 : i32
    %c0_i32_1 = arith.constant 0 : i32
    return %c0_i32, %c0_i32_0 : i32, i32
  }
  func.func @transform_2(%arg0: i32) -> (i32, i32) {
    %c0_i32 = arith.constant 0 : i32
    %c0_i32_0 = arith.constant 0 : i32
    %c0_i32_1 = arith.constant 0 : i32
    return %c0_i32, %c0_i32_0 : i32, i32
  }
  func.func @transform_3(%arg0: i32) -> (i32, i32) {
    %c0_i32 = arith.constant 0 : i32
    %c0_i32_0 = arith.constant 0 : i32
    %c0_i32_1 = arith.constant 0 : i32
    return %c0_i32, %c0_i32_0 : i32, i32
  }
  func.func @transform_4(%arg0: i32) -> (i32, i32) {
    %c0_i32 = arith.constant 0 : i32
    %c0_i32_0 = arith.constant 0 : i32
    %c0_i32_1 = arith.constant 0 : i32
    return %c0_i32, %c0_i32_0 : i32, i32
  }
  func.func @transform_5(%arg0: i32) -> (i32, i32) {
    %c0_i32 = arith.constant 0 : i32
    %c0_i32_0 = arith.constant 0 : i32
    %c0_i32_1 = arith.constant 0 : i32
    return %c0_i32, %c0_i32_0 : i32, i32
  }
  func.func @transform_6(%arg0: i32) -> (i32, i32) {
    %c0_i32 = arith.constant 0 : i32
    %c0_i32_0 = arith.constant 0 : i32
    %c0_i32_1 = arith.constant 0 : i32
    return %c0_i32, %c0_i32_0 : i32, i32
  }
  func.func @transform_7(%arg0: i32) -> (i32, i32) {
    %c0_i32 = arith.constant 0 : i32
    %c0_i32_0 = arith.constant 0 : i32
    return %arg0, %c0_i32 : i32, i32
  }
}

</mosaic_0001>

<llo_original>
// kernel: actor_forward.1
$region0: #{actor_forward.1}
  #allocation0 [shape = 'u32[]', space=smem, size = 0x4, offset = 0x4, fixed_abs, tag = 'smem constant byte address 0x4 - core index']
  #allocation1 [shape = 'u32[72,128]{1,0:T(1,128)}', space=vmem, size = 0x9000, scoped, tag = 'internal scratch']
  %s0 = inlined_call_operand.vmem [shape: bf16[8,128], index: 0, kind: input, shape index: {}]
  %s1 = inlined_call_operand.vmem [shape: bf16[128,128], index: 1, kind: input, shape index: {}]
  %s2 = inlined_call_operand.vmem [shape: f32[1,128], index: 2, kind: input, shape index: {}]
  %s3 = inlined_call_operand.vmem [shape: bf16[128,128], index: 3, kind: input, shape index: {}]
  %s4 = inlined_call_operand.vmem [shape: f32[1,128], index: 4, kind: input, shape index: {}]
  %s5 = inlined_call_operand.vmem [shape: bf16[128,128], index: 5, kind: input, shape index: {}]
  %s6 = inlined_call_operand.vmem [shape: f32[1,128], index: 6, kind: input, shape index: {}]
  %s7 = inlined_call_operand.hbm [shape: f32[8,128], index: 7, kind: output, shape index: {}]
  %s8 = sld [smem:[#allocation0]]
  $region38: #{actor_forward.1} parent=0
    _
  %s10 = ssub.s32 1, %s8
  %s11 = scalar_select 0, %s10, %s8
  $region1: #{actor_forward.1} parent=0
    #allocation2 [shape = 'u8[4096]{0}', space=vmem, size = 0x1000, scoped, tag = 'output window, operand 0, single buffered']
    #allocation3 [shape = 's32[1]{0}', space=sflag, size = 0x4, scoped, tag = 'scoped memory for actor_forward.1']
    %12 = vsyncpa [#allocation3], 0
    // Predicated region
    $region2: #{actor_forward.1} parent=1 // pred_check
      _
    $region3: #{actor_forward.1} parent=1 // pred_check_branch
      %14 = sbr.rel (0) target = $region5
    $region4: #{actor_forward.1} parent=1 // pred_region
      _
    $region5: #{actor_forward.1} parent=1 // pred_fallthru
      _
    // Predicated region
    $region6: #{actor_forward.1} parent=1 // pred_check
      _
    $region7: #{actor_forward.1} parent=1 // pred_check_branch
      %16 = sbr.rel (0) target = $region9
    $region8: #{actor_forward.1} parent=1 // pred_region
      _
    $region9: #{actor_forward.1} parent=1 // pred_fallthru
      _
    // Predicated region
    $region10: #{actor_forward.1} parent=1 // pred_check
      _
    $region11: #{actor_forward.1} parent=1 // pred_check_branch
      %18 = sbr.rel (0) target = $region13
    $region12: #{actor_forward.1} parent=1 // pred_region
      _
    $region13: #{actor_forward.1} parent=1 // pred_fallthru
      _
    // Predicated region
    $region14: #{actor_forward.1} parent=1 // pred_check
      _
    $region15: #{actor_forward.1} parent=1 // pred_check_branch
      %20 = sbr.rel (0) target = $region17
    $region16: #{actor_forward.1} parent=1 // pred_region
      _
    $region17: #{actor_forward.1} parent=1 // pred_fallthru
      _
    // Predicated region
    $region18: #{actor_forward.1} parent=1 // pred_check
      _
    $region19: #{actor_forward.1} parent=1 // pred_check_branch
      %22 = sbr.rel (0) target = $region21
    $region20: #{actor_forward.1} parent=1 // pred_region
      _
    $region21: #{actor_forward.1} parent=1 // pred_fallthru
      _
    // Predicated region
    $region22: #{actor_forward.1} parent=1 // pred_check
      _
    $region23: #{actor_forward.1} parent=1 // pred_check_branch
      %24 = sbr.rel (0) target = $region25
    $region24: #{actor_forward.1} parent=1 // pred_region
      _
    $region25: #{actor_forward.1} parent=1 // pred_fallthru
      _
    // Predicated region
    $region26: #{actor_forward.1} parent=1 // pred_check
      _
    $region27: #{actor_forward.1} parent=1 // pred_check_branch
      %26 = sbr.rel (0) target = $region29
    $region28: #{actor_forward.1} parent=1 // pred_region
      _
    $region29: #{actor_forward.1} parent=1 // pred_fallthru
      _
    %v27 = vld [vmem:[%s0] sm:$0xf]
    %v28 = vld [vmem:[%s1] sm:$0xf]
    %v29 = vld [vmem:[%s1 + $0x4] sm:$0xf]
    %v30 = vld [vmem:[%s1 + $0x8] sm:$0xf]
    %v31 = vld [vmem:[%s1 + $0xc] sm:$0xf]
    %v32 = vld [vmem:[%s1 + $0x10] sm:$0xf]
    %v33 = vld [vmem:[%s1 + $0x14] sm:$0xf]
    %v34 = vld [vmem:[%s1 + $0x18] sm:$0xf]
    %v35 = vld [vmem:[%s1 + $0x1c] sm:$0xf]
    %v36 = vld [vmem:[%s1 + $0x20] sm:$0xf]
    %v37 = vld [vmem:[%s1 + $0x24] sm:$0xf]
    %v38 = vld [vmem:[%s1 + $0x28] sm:$0xf]
    %v39 = vld [vmem:[%s1 + $0x2c] sm:$0xf]
    %v40 = vld [vmem:[%s1 + $0x30] sm:$0xf]
    %v41 = vld [vmem:[%s1 + $0x34] sm:$0xf]
    %v42 = vld [vmem:[%s1 + $0x38] sm:$0xf]
    %v43 = vld [vmem:[%s1 + $0x3c] sm:$0xf]
    %v44 = vld [vmem:[%s2] sm:$0x1]
    %v46 = vperm.slane %v44, 0
    %v64 = vunpack.c.l.b16 %v28
    %v65 = vunpack.c.l.b16 %v29
    %v66 = vunpack.c.l.b16 %v30
    %v67 = vunpack.c.l.b16 %v31
    %v68 = vunpack.c.l.b16 %v32
    %v69 = vunpack.c.l.b16 %v33
    %v70 = vunpack.c.l.b16 %v34
    %v71 = vunpack.c.l.b16 %v35
    %v72 = vunpack.c.l.b16 %v36
    %v73 = vunpack.c.l.b16 %v37
    %v74 = vunpack.c.l.b16 %v38
    %v75 = vunpack.c.l.b16 %v39
    %v76 = vunpack.c.l.b16 %v40
    %v77 = vunpack.c.l.b16 %v41
    %v78 = vunpack.c.l.b16 %v42
    %v79 = vunpack.c.l.b16 %v43
    %v80 = vpack.c.b16 %v65, %v64
    %v81 = vpack.c.b16 %v67, %v66
    %v82 = vpack.c.b16 %v69, %v68
    %v83 = vpack.c.b16 %v71, %v70
    %v84 = vpack.c.b16 %v73, %v72
    %v85 = vpack.c.b16 %v75, %v74
    %v86 = vpack.c.b16 %v77, %v76
    %v87 = vpack.c.b16 %v79, %v78
    %96 = vmatpush.bf16.msra.mxu0 %v87
    %97 = vmatpush.bf16.msra.mxu0 %v86
    %98 = vmatpush.bf16.msra.mxu0 %v85
    %99 = vmatpush.bf16.msra.mxu0 %v84
    %100 = vmatpush.bf16.msra.mxu0 %v83
    %101 = vmatpush.bf16.msra.mxu0 %v82
    %102 = vmatpush.bf16.msra.mxu0 %v81
    %103 = vmatpush.bf16.msra.mxu0 %v80
    %104 = vmatmul.bf16.gmra.mxu0 %v27
    %v105 = vpop.f32.mrf.mxu0
    %v106 = vadd.f32 %v46, %v105
    %v107 = vpop.f32.mrf.mxu0
    %108 = vdwg.mxu0
    %v109 = vtanh.pop %v106
    %v110 = vpack.c.bf16 %v109, %v109
    %v111 = vld [vmem:[%s3] sm:$0xf]
    %v112 = vld [vmem:[%s3 + $0x4] sm:$0xf]
    %v113 = vld [vmem:[%s3 + $0x8] sm:$0xf]
    %v114 = vld [vmem:[%s3 + $0xc] sm:$0xf]
    %v115 = vld [vmem:[%s3 + $0x10] sm:$0xf]
    %v116 = vld [vmem:[%s3 + $0x14] sm:$0xf]
    %v117 = vld [vmem:[%s3 + $0x18] sm:$0xf]
    %v118 = vld [vmem:[%s3 + $0x1c] sm:$0xf]
    %v119 = vld [vmem:[%s3 + $0x20] sm:$0xf]
    %v120 = vld [vmem:[%s3 + $0x24] sm:$0xf]
    %v121 = vld [vmem:[%s3 + $0x28] sm:$0xf]
    %v122 = vld [vmem:[%s3 + $0x2c] sm:$0xf]
    %v123 = vld [vmem:[%s3 + $0x30] sm:$0xf]
    %v124 = vld [vmem:[%s3 + $0x34] sm:$0xf]
    %v125 = vld [vmem:[%s3 + $0x38] sm:$0xf]
    %v126 = vld [vmem:[%s3 + $0x3c] sm:$0xf]
    %v127 = vld [vmem:[%s4] sm:$0x1]
    %v129 = vperm.slane %v127, 0
    %v147 = vunpack.c.l.b16 %v111
    %v148 = vunpack.c.l.b16 %v112
    %v149 = vunpack.c.l.b16 %v113
    %v150 = vunpack.c.l.b16 %v114
    %v151 = vunpack.c.l.b16 %v115
    %v152 = vunpack.c.l.b16 %v116
    %v153 = vunpack.c.l.b16 %v117
    %v154 = vunpack.c.l.b16 %v118
    %v155 = vunpack.c.l.b16 %v119
    %v156 = vunpack.c.l.b16 %v120
    %v157 = vunpack.c.l.b16 %v121
    %v158 = vunpack.c.l.b16 %v122
    %v159 = vunpack.c.l.b16 %v123
    %v160 = vunpack.c.l.b16 %v124
    %v161 = vunpack.c.l.b16 %v125
    %v162 = vunpack.c.l.b16 %v126
    %v163 = vpack.c.b16 %v148, %v147
    %v164 = vpack.c.b16 %v150, %v149
    %v165 = vpack.c.b16 %v152, %v151
    %v166 = vpack.c.b16 %v154, %v153
    %v167 = vpack.c.b16 %v156, %v155
    %v168 = vpack.c.b16 %v158, %v157
    %v169 = vpack.c.b16 %v160, %v159
    %v170 = vpack.c.b16 %v162, %v161
    %179 = vmatpush.bf16.msra.mxu0 %v170
    %180 = vmatpush.bf16.msra.mxu0 %v169
    %181 = vmatpush.bf16.msra.mxu0 %v168
    %182 = vmatpush.bf16.msra.mxu0 %v167
    %183 = vmatpush.bf16.msra.mxu0 %v166
    %184 = vmatpush.bf16.msra.mxu0 %v165
    %185 = vmatpush.bf16.msra.mxu0 %v164
    %186 = vmatpush.bf16.msra.mxu0 %v163
    %187 = vmatmul.bf16.gmra.mxu0 %v110
    %v188 = vpop.f32.mrf.mxu0
    %v189 = vadd.f32 %v129, %v188
    %v190 = vpop.f32.mrf.mxu0
    %191 = vdwg.mxu0
    %v192 = vtanh.pop %v189
    %v193 = vpack.c.bf16 %v192, %v192
    %v194 = vld [vmem:[%s5] sm:$0xf]
    %v195 = vld [vmem:[%s5 + $0x4] sm:$0xf]
    %v196 = vld [vmem:[%s5 + $0x8] sm:$0xf]
    %v197 = vld [vmem:[%s5 + $0xc] sm:$0xf]
    %v198 = vld [vmem:[%s5 + $0x10] sm:$0xf]
    %v199 = vld [vmem:[%s5 + $0x14] sm:$0xf]
    %v200 = vld [vmem:[%s5 + $0x18] sm:$0xf]
    %v201 = vld [vmem:[%s5 + $0x1c] sm:$0xf]
    %v202 = vld [vmem:[%s5 + $0x20] sm:$0xf]
    %v203 = vld [vmem:[%s5 + $0x24] sm:$0xf]
    %v204 = vld [vmem:[%s5 + $0x28] sm:$0xf]
    %v205 = vld [vmem:[%s5 + $0x2c] sm:$0xf]
    %v206 = vld [vmem:[%s5 + $0x30] sm:$0xf]
    %v207 = vld [vmem:[%s5 + $0x34] sm:$0xf]
    %v208 = vld [vmem:[%s5 + $0x38] sm:$0xf]
    %v209 = vld [vmem:[%s5 + $0x3c] sm:$0xf]
    %v210 = vld [vmem:[%s6] sm:$0x1]
    %v212 = vperm.slane %v210, 0
    %v230 = vunpack.c.l.b16 %v194
    %v231 = vunpack.c.l.b16 %v195
    %v232 = vunpack.c.l.b16 %v196
    %v233 = vunpack.c.l.b16 %v197
    %v234 = vunpack.c.l.b16 %v198
    %v235 = vunpack.c.l.b16 %v199
    %v236 = vunpack.c.l.b16 %v200
    %v237 = vunpack.c.l.b16 %v201
    %v238 = vunpack.c.l.b16 %v202
    %v239 = vunpack.c.l.b16 %v203
    %v240 = vunpack.c.l.b16 %v204
    %v241 = vunpack.c.l.b16 %v205
    %v242 = vunpack.c.l.b16 %v206
    %v243 = vunpack.c.l.b16 %v207
    %v244 = vunpack.c.l.b16 %v208
    %v245 = vunpack.c.l.b16 %v209
    %v246 = vpack.c.b16 %v231, %v230
    %v247 = vpack.c.b16 %v233, %v232
    %v248 = vpack.c.b16 %v235, %v234
    %v249 = vpack.c.b16 %v237, %v236
    %v250 = vpack.c.b16 %v239, %v238
    %v251 = vpack.c.b16 %v241, %v240
    %v252 = vpack.c.b16 %v243, %v242
    %v253 = vpack.c.b16 %v245, %v244
    %262 = vmatpush.bf16.msra.mxu0 %v253
    %263 = vmatpush.bf16.msra.mxu0 %v252
    %264 = vmatpush.bf16.msra.mxu0 %v251
    %265 = vmatpush.bf16.msra.mxu0 %v250
    %266 = vmatpush.bf16.msra.mxu0 %v249
    %267 = vmatpush.bf16.msra.mxu0 %v248
    %268 = vmatpush.bf16.msra.mxu0 %v247
    %269 = vmatpush.bf16.msra.mxu0 %v246
    %270 = vmatmul.bf16.gmra.mxu0 %v193
    %v271 = vpop.f32.mrf.mxu0
    %v272 = vadd.f32 %v212, %v271
    %v273 = vpop.f32.mrf.mxu0
    %274 = vdwg.mxu0
    %275 = vmax.xlane.f32.xlu0 %v272
    %v276 = vpop.xlane.xlu0 %275
    %v277 = vsub.f32 %v272, %v276
    %v278 = vmul.f32 %v277, 1.442695
    %v279 = vpow.pop %v278
    %280 = vadd.xlane.f32.xlu0 %v279
    %v281 = vpop.xlane.xlu0 %280
    %v282 = vrcp.pop %v281
    %v283 = vmul.f32 %v281, %v282
    %v284 = vsub.f32 2.0, %v283
    %v285 = vmul.f32 %v282, %v284
    %v286 = vmul.f32 %v279, %v285
    %287 = vst [vmem:[#allocation2] sm:$0xff] %v286
    // Predicated region
    $region30: #{actor_forward.1} parent=1 // pred_check
      _
    $region31: #{actor_forward.1} parent=1 // pred_check_branch
      %289 = sbr.rel (0) target = $region33
    $region32: #{actor_forward.1} parent=1 // pred_region
      %291 = vsyncadd [#allocation3], 0
      %s293 = sshll.u32 [#allocation2], 4
      %s294 = int_to_ptr.vmem [resolvable:$true] %s293
      %s295 = sshll.u32 %s7, 4
      %s296 = int_to_ptr.hbm [resolvable:$true] %s295
      %298 = dma.vmem_to_hbm [thread:$0]  %s294, 128, %s296, [#allocation3]
    $region33: #{actor_forward.1} parent=1 // pred_fallthru
      _
    // Predicated region
    $region34: #{actor_forward.1} parent=1 // pred_check
      _
    $region35: #{actor_forward.1} parent=1 // pred_check_branch
      %300 = sbr.rel (0) target = $region37
    $region36: #{actor_forward.1} parent=1 // pred_region
      %302 = dma.done [#allocation3], 128
    $region37: #{actor_forward.1} parent=1 // pred_fallthru
      _
    %303 = vsyncpa [#allocation3], 1

</llo_original>
